<compile_context>
chip_gen: v6e
topology: v6e:2x2x1
jax: 0.10.0
libtpu: 0.0.40
codegen_flags: <defaults>
</compile_context>

<pallas_src>
import functools

import jax
import jax.numpy as jnp
from jax.experimental import pallas as pl
from jax.experimental.pallas import tpu as pltpu


MAX_BATCH_TILE = 2048  # multiple of 8 and 128; ~0.13 MB bf16 x + ~1 MB f32 h per tile


def _sigmoid(z):
    # sigmoid(z) == 0.5 * (tanh(z/2) + 1): one EUP transcendental per element.
    return 0.5 * (jnp.tanh(0.5 * z) + 1.0)


def mlp_kernel(x_ref, w1_ref, c_ref, b2_ref, out_ref, *, lane_dense):
    # Hidden layer on the MXU: (tb, N) bf16 @ (N, Hp) bf16 -> f32 accumulate,
    # then bias + sigmoid on VPU/EUP.  Hp is a multiple of 128 -> full-lane
    # vregs; padded lanes give sigmoid(0)=0.5 but meet zero w2 lanes below.
    h = jnp.dot(x_ref[...], w1_ref[...], preferred_element_type=jnp.float32)
    h = _sigmoid(h + c_ref[0:1, :])                      # (tb, Hp) f32

    b2 = b2_ref[0]                                       # scalar from SMEM
    if lane_dense:
        # Output layer as w2_row @ h^T on the MXU (contract the shared hidden
        # axis).  Batch lands on lanes -> the store is a full-lane 1-D row of
        # f32[B] instead of tb/8 masked one-lane stores.
        o = jnp.einsum("oh,bh->ob", c_ref[1:2, :], h,
                       preferred_element_type=jnp.float32)   # (1, tb)
        out_ref[...] = _sigmoid(o + b2)[0]                   # (tb,)
    else:
        # Tiny / ragged-batch path: VPU multiply + XLU lane reduction, (tb, 1) store.
        o = jnp.sum(h * c_ref[1:2, :], axis=-1, keepdims=True)  # (tb, 1)
        out_ref[...] = _sigmoid(o + b2)


def _tensorcores_per_chip():
    try:
        info = pltpu.get_tpu_info()
    except Exception:
        return 1
    for name in ("num_cores", "core_count", "num_tensor_cores", "num_tensorcores"):
        v = getattr(info, name, None)
        if isinstance(v, int) and v > 0:
            return v
    return 1


def _batch_tile(B, max_tb):
    max_tb = max(8, (max_tb // 8) * 8)
    if B > max_tb:
        return max_tb
    # Split moderate batches in two so ("parallel",) shards the batch across
    # both TensorCores on v7x; skipped on single-core chips (v5e/v6e) where it
    # would only add per-step overhead.
    if B >= 1024 and B % 256 == 0 and _tensorcores_per_chip() >= 2:
        return B // 2
    return B


def net_forward(x, w1_p, consts_p, b2, *, max_tb=MAX_BATCH_TILE):
    """Pallas forward pass of Net.

    x        : (B, N)  bfloat16 (or float32) inputs
    w1_p     : (N, Hp) bfloat16 -- W1^T, zero-padded beyond the real hidden H
    consts_p : (2, Hp) float32  -- row 0 = b1 (padded), row 1 = w2 row (padded)
    b2       : (1,)    float32  -- scalar output bias, lives in SMEM
    returns  : (B, 1)  float32
    """
    B, N = x.shape
    Hp = w1_p.shape[1]

    tb = _batch_tile(B, max_tb)
    grid = (pl.cdiv(B, tb),)
    # Lane-dense output only when tiles divide B exactly (no boundary clamping
    # to reconcile) and each tile fills whole 128-lane vregs.
    lane_dense = (tb % 128 == 0) and (B % tb == 0)

    in_specs = [
        pl.BlockSpec((tb, N), lambda i: (i, 0)),             # x: tiled over batch
        pl.BlockSpec((N, Hp), lambda i: (0, 0)),             # W1^T: resident
        pl.BlockSpec((2, Hp), lambda i: (0, 0)),             # [b1; w2row]: resident
        pl.BlockSpec(memory_space=pltpu.MemorySpace.SMEM),   # b2 scalar
    ]
    kernel = functools.partial(mlp_kernel, lane_dense=lane_dense)
    params = pltpu.CompilerParams(dimension_semantics=("parallel",))

    if lane_dense:
        out1d = pl.pallas_call(
            kernel,
            out_shape=jax.ShapeDtypeStruct((B,), jnp.float32),
            grid=grid,
            in_specs=in_specs,
            out_specs=pl.BlockSpec((tb,), lambda i: (i,)),
            compiler_params=params,
        )(x, w1_p, consts_p, b2)
        return out1d.reshape(B, 1)

    return pl.pallas_call(
        kernel,
        out_shape=jax.ShapeDtypeStruct((B, 1), jnp.float32),
        grid=grid,
        in_specs=in_specs,
        out_specs=pl.BlockSpec((tb, 1), lambda i: (i, 0)),
        compiler_params=params,
    )(x, w1_p, consts_p, b2)


def init_params(key, n):
    """Deterministic init mimicking nn.Linear's U(-1/sqrt(fan_in), 1/sqrt(fan_in)).
    w1 is stored as W1^T (n, hidden); w2 as W2^T (hidden, 1)."""
    hidden = (n + 1) // 2
    k1, k2, k3, k4 = jax.random.split(key, 4)
    bound1 = 1.0 / jnp.sqrt(n)
    bound2 = 1.0 / jnp.sqrt(hidden)
    w1 = jax.random.uniform(k1, (n, hidden), jnp.float32, -bound1, bound1)
    b1 = jax.random.uniform(k2, (hidden,), jnp.float32, -bound1, bound1)
    w2 = jax.random.uniform(k3, (hidden, 1), jnp.float32, -bound2, bound2)
    b2 = jax.random.uniform(k4, (1,), jnp.float32, -bound2, bound2)
    return w1, b1, w2, b2


def pack_params(w1, b1, w2, lane=128):
    """One-time layout plumbing (outside the kernel): zero-pad the hidden dim
    up to 128 lanes, store W1^T in bf16, and stack b1 + the w2 row into a
    single resident (2, Hp) f32 block.  Padded hidden lanes (sigmoid(0)=0.5)
    meet zero w2 lanes, so the math is unchanged."""
    n, h = w1.shape
    hp = ((h + lane - 1) // lane) * lane
    w1_p = jnp.zeros((n, hp), jnp.bfloat16).at[:, :h].set(w1.astype(jnp.bfloat16))
    consts = jnp.zeros((2, hp), jnp.float32)
    consts = consts.at[0, :h].set(b1.reshape(h))
    consts = consts.at[1, :h].set(w2.reshape(h))
    return w1_p, consts


def reference(x_f32, w1, b1, w2, b2):
    """Plain-JAX forward (same math as the PyTorch module), using the same
    bf16-rounded W1 the kernel reads."""
    w1r = w1.astype(jnp.bfloat16).astype(jnp.float32)
    h = jax.nn.sigmoid(x_f32 @ w1r + b1)
    return jax.nn.sigmoid(h @ w2 + b2)


if __name__ == "__main__":
    key = jax.random.PRNGKey(0)
    n = 32                      # Net(32): 32 x 17 x 1

    kp, kx1, kx2, kx3 = jax.random.split(key, 4)
    w1, b1, w2, b2 = init_params(kp, n)
    w1_p, consts_p = pack_params(w1, b1, w2)

    checks = [
        (jax.random.normal(kx1, (8, n), jnp.float32), {}),      # tiny, latency-bound path
        (jax.random.normal(kx2, (1024, n), jnp.float32), {}),   # bf16 + lane-dense f32[B] output
        (jax.random.normal(kx3, (200, n), jnp.float32),
         dict(max_tb=64)),                                      # multi-tile, clamped last tile
    ]

    for x32, kw in checks:
        xb = x32.astype(jnp.bfloat16)
        out = net_forward(xb, w1_p, consts_p, b2, **kw)
        jax.block_until_ready(out)
        ref = reference(xb.astype(jnp.float32), w1, b1, w2, b2)
        assert out.shape == (x32.shape[0], 1), out.shape
        assert jnp.allclose(out, ref, atol=3e-3), (
            f"mismatch vs reference at B={x32.shape[0]}: "
            f"max|err|={float(jnp.max(jnp.abs(out - ref)))}")

    print("KERNEL_OK")
</pallas_src>

<mosaic_0001>
module attributes {stable_mosaic.version = 11 : i64} {
  func.func @mlp_kernel(%arg0: i32, %arg1: memref<8x32xbf16, #tpu.memory_space<vmem>>, %arg2: memref<32x128xbf16, #tpu.memory_space<vmem>>, %arg3: memref<2x128xf32, #tpu.memory_space<vmem>>, %arg4: memref<1xf32, #tpu.memory_space<smem>>, %arg5: memref<8x1xf32, #tpu.memory_space<vmem>>) attributes {dimension_semantics = [#tpu.dimension_semantics<parallel>], iteration_bounds = array<i64: 1>, scalar_prefetch = 0 : i64, scratch_operands = 0 : i64, tpu.core_type = #tpu.core_type<tc>, window_params = [{transform_indices = @transform_0, window_bounds = array<i64: 8, 32>}, {pipeline_mode = #tpu.pipeline_mode<synchronous>, transform_indices = @transform_1, window_bounds = array<i64: 32, 128>}, {pipeline_mode = #tpu.pipeline_mode<synchronous>, transform_indices = @transform_2, window_bounds = array<i64: 2, 128>}, {transform_indices = @transform_3, window_bounds = array<i64: 1>}, {transform_indices = @transform_4, window_bounds = array<i64: 8, 1>}]} {
    %c0 = arith.constant 0 : index
    %c0_0 = arith.constant 0 : index
    %0 = vector.load %arg1[%c0, %c0_0] : memref<8x32xbf16, #tpu.memory_space<vmem>>, vector<8x32xbf16>
    %c0_1 = arith.constant 0 : index
    %c0_2 = arith.constant 0 : index
    %1 = vector.load %arg2[%c0_1, %c0_2] : memref<32x128xbf16, #tpu.memory_space<vmem>>, vector<32x128xbf16>
    %cst = arith.constant dense<0.000000e+00> : vector<8x128xf32>
    %2 = tpu.matmul %0, %1, %cst {dimension_numbers = #tpu.dot_dimension_numbers<[1], [0], [0], [1], [0, 0, 1, 1], [], []>} : vector<8x32xbf16>, vector<32x128xbf16>, vector<8x128xf32> -> vector<8x128xf32>
    %c0_3 = arith.constant 0 : index
    %c0_4 = arith.constant 0 : index
    %3 = vector.load %arg3[%c0_3, %c0_4] : memref<2x128xf32, #tpu.memory_space<vmem>>, vector<1x128xf32>
    %4 = vector.broadcast %3 : vector<1x128xf32> to vector<8x128xf32>
    %5 = arith.addf %2, %4 : vector<8x128xf32>
    %cst_5 = arith.constant 5.000000e-01 : f32
    %6 = vector.broadcast %cst_5 : f32 to vector<8x128xf32>
    %7 = arith.mulf %6, %5 : vector<8x128xf32>
    %8 = math.tanh %7 : vector<8x128xf32>
    %cst_6 = arith.constant 1.000000e+00 : f32
    %9 = vector.broadcast %cst_6 : f32 to vector<8x128xf32>
    %10 = arith.addf %8, %9 : vector<8x128xf32>
    %cst_7 = arith.constant 5.000000e-01 : f32
    %11 = vector.broadcast %cst_7 : f32 to vector<8x128xf32>
    %12 = arith.mulf %11, %10 : vector<8x128xf32>
    %c0_8 = arith.constant 0 : index
    %13 = memref.load %arg4[%c0_8] : memref<1xf32, #tpu.memory_space<smem>>
    %c1 = arith.constant 1 : index
    %c0_9 = arith.constant 0 : index
    %14 = vector.load %arg3[%c1, %c0_9] : memref<2x128xf32, #tpu.memory_space<vmem>>, vector<1x128xf32>
    %15 = vector.broadcast %14 : vector<1x128xf32> to vector<8x128xf32>
    %16 = arith.mulf %12, %15 : vector<8x128xf32>
    %cst_10 = arith.constant dense<0.000000e+00> : vector<8xf32>
    %17 = vector.multi_reduction <add>, %16, %cst_10 [1] : vector<8x128xf32> to vector<8xf32>
    %18 = vector.shape_cast %17 : vector<8xf32> to vector<8x1xf32>
    %19 = vector.broadcast %13 : f32 to vector<8x1xf32>
    %20 = arith.addf %18, %19 : vector<8x1xf32>
    %cst_11 = arith.constant 5.000000e-01 : f32
    %21 = vector.broadcast %cst_11 : f32 to vector<8x1xf32>
    %22 = arith.mulf %21, %20 : vector<8x1xf32>
    %23 = math.tanh %22 : vector<8x1xf32>
    %cst_12 = arith.constant 1.000000e+00 : f32
    %24 = vector.broadcast %cst_12 : f32 to vector<8x1xf32>
    %25 = arith.addf %23, %24 : vector<8x1xf32>
    %cst_13 = arith.constant 5.000000e-01 : f32
    %26 = vector.broadcast %cst_13 : f32 to vector<8x1xf32>
    %27 = arith.mulf %26, %25 : vector<8x1xf32>
    %c0_14 = arith.constant 0 : index
    %c0_15 = arith.constant 0 : index
    %28 = vector.load %arg5[%c0_14, %c0_15] : memref<8x1xf32, #tpu.memory_space<vmem>>, vector<8x1xf32>
    tpu.vector_store %arg5[%c0_14, %c0_15], %27 {strides = array<i32>} : memref<8x1xf32, #tpu.memory_space<vmem>>, vector<8x1xf32>,
    return
  }
  func.func @transform_0(%arg0: i32) -> (i32, i32) {
    %c0_i32 = arith.constant 0 : i32
    %c0_i32_0 = arith.constant 0 : i32
    return %arg0, %c0_i32 : i32, i32
  }
  func.func @transform_1(%arg0: i32) -> (i32, i32) {
    %c0_i32 = arith.constant 0 : i32
    %c0_i32_0 = arith.constant 0 : i32
    %c0_i32_1 = arith.constant 0 : i32
    return %c0_i32, %c0_i32_0 : i32, i32
  }
  func.func @transform_2(%arg0: i32) -> (i32, i32) {
    %c0_i32 = arith.constant 0 : i32
    %c0_i32_0 = arith.constant 0 : i32
    %c0_i32_1 = arith.constant 0 : i32
    return %c0_i32, %c0_i32_0 : i32, i32
  }
  func.func @transform_3(%arg0: i32) -> i32 {
    %c0_i32 = arith.constant 0 : i32
    %c0_i32_0 = arith.constant 0 : i32
    return %c0_i32 : i32
  }
  func.func @transform_4(%arg0: i32) -> (i32, i32) {
    %c0_i32 = arith.constant 0 : i32
    %c0_i32_0 = arith.constant 0 : i32
    return %arg0, %c0_i32 : i32, i32
  }
}

</mosaic_0001>

<llo_original>
// kernel: tpu_custom_call.1
$region0: #{tpu_custom_call.1}
  #allocation0 [shape = 'u32[]', space=smem, size = 0x4, offset = 0x4, fixed_abs, tag = 'smem constant byte address 0x4 - core index']
  #allocation1 [shape = 'u32[144,128]{1,0:T(1,128)}', space=vmem, size = 0x12000, scoped, tag = 'internal scratch']
  #allocation2 [shape = 'f32[1]{0:T(128)S(6)}', space=smem, size = 0x200, scoped, tag = 'scoped memory for tpu_custom_call.1']
  %s0 = inlined_call_operand.hbm [shape: bf16[8,32], index: 0, kind: input, shape index: {}]
  %s1 = inlined_call_operand.hbm [shape: bf16[32,128], index: 1, kind: input, shape index: {}]
  %s2 = inlined_call_operand.vmem [shape: f32[2,128], index: 2, kind: input, shape index: {}]
  %s3 = inlined_call_operand.<no memory space> [shape: f32[1], index: 3, kind: input, shape index: {}]
  %s4 = inlined_call_operand.vmem [shape: f32[8,1], index: 4, kind: output, shape index: {}]
  %s5 = sld [smem:[#allocation0]]
  $region34: #{tpu_custom_call.1} parent=0
    _
  %s7 = ssub.s32 1, %s5
  %s8 = scalar_select 0, %s7, %s5
  %9 = sst [smem:[#allocation2]] %s3
  $region1: #{tpu_custom_call.1} parent=0
    #allocation3 [shape = 'u8[2048]{0}', space=vmem, size = 0x800, scoped, tag = 'input window, operand 0, single buffered']
    #allocation4 [shape = 's32[1]{0}', space=sflag, size = 0x4, scoped, tag = 'scoped memory for tpu_custom_call.1']
    #allocation5 [shape = 'u8[8192]{0}', space=vmem, size = 0x2000, scoped, tag = 'input window, operand 1, single buffered']
    #allocation6 [shape = 's32[1]{0}', space=sflag, size = 0x4, scoped, tag = 'scoped memory for tpu_custom_call.1']
    %10 = vsyncpa [#allocation4], 0
    %11 = vsyncpa [#allocation6], 0
    // Predicated region
    $region2: #{tpu_custom_call.1} parent=1 // pred_check
      _
    $region3: #{tpu_custom_call.1} parent=1 // pred_check_branch
      %13 = sbr.rel (0) target = $region5
    $region4: #{tpu_custom_call.1} parent=1 // pred_region
      %s15 = ssub.s32 64, 64
      %16 = vsyncadd [#allocation4], %s15
      %s18 = sshll.u32 [#allocation3], 4
      %s19 = int_to_ptr.vmem [resolvable:$true] %s18
      %21 = dma.hbm_to_vmem [thread:$0]  %s0, 64, %s19, [#allocation4]
    $region5: #{tpu_custom_call.1} parent=1 // pred_fallthru
      _
    // Predicated region
    $region6: #{tpu_custom_call.1} parent=1 // pred_check
      _
    $region7: #{tpu_custom_call.1} parent=1 // pred_check_branch
      %23 = sbr.rel (0) target = $region9
    $region8: #{tpu_custom_call.1} parent=1 // pred_region
      %s25 = ssub.s32 256, 256
      %26 = vsyncadd [#allocation6], %s25
      %s27 = sshll.u32 [#allocation5], 4
      %s28 = int_to_ptr.vmem [resolvable:$true] %s27
      %33 = dma.hbm_to_vmem [thread:$0]  %s1, 256, %s28, [#allocation6], 64, 64, 4
    $region9: #{tpu_custom_call.1} parent=1 // pred_fallthru
      _
    // Predicated region
    $region10: #{tpu_custom_call.1} parent=1 // pred_check
      _
    $region11: #{tpu_custom_call.1} parent=1 // pred_check_branch
      %35 = sbr.rel (0) target = $region13
    $region12: #{tpu_custom_call.1} parent=1 // pred_region
      _
    $region13: #{tpu_custom_call.1} parent=1 // pred_fallthru
      _
    // Predicated region
    $region14: #{tpu_custom_call.1} parent=1 // pred_check
      _
    $region15: #{tpu_custom_call.1} parent=1 // pred_check_branch
      %37 = sbr.rel (0) target = $region17
    $region16: #{tpu_custom_call.1} parent=1 // pred_region
      _
    $region17: #{tpu_custom_call.1} parent=1 // pred_fallthru
      _
    // Predicated region
    $region18: #{tpu_custom_call.1} parent=1 // pred_check
      _
    $region19: #{tpu_custom_call.1} parent=1 // pred_check_branch
      %39 = sbr.rel (0) target = $region21
    $region20: #{tpu_custom_call.1} parent=1 // pred_region
      %40 = dma.done [#allocation4], 64
    $region21: #{tpu_custom_call.1} parent=1 // pred_fallthru
      _
    // Predicated region
    $region22: #{tpu_custom_call.1} parent=1 // pred_check
      _
    $region23: #{tpu_custom_call.1} parent=1 // pred_check_branch
      %42 = sbr.rel (0) target = $region25
    $region24: #{tpu_custom_call.1} parent=1 // pred_region
      %43 = dma.done [#allocation6], 256
    $region25: #{tpu_custom_call.1} parent=1 // pred_fallthru
      _
    %v45 = vld [vmem:[#allocation3] sm:$0xf]
    %v46 = vld [vmem:[#allocation5] sm:$0xf]
    %v47 = vld [vmem:[#allocation5 + $0x4] sm:$0xf]
    %v48 = vld [vmem:[#allocation5 + $0x8] sm:$0xf]
    %v49 = vld [vmem:[#allocation5 + $0xc] sm:$0xf]
    %v50 = vld [vmem:[%s2] sm:$0x1]
    %v51 = vlaneseq
    %v52 = vshrl.u32 %v51, 7
    %v53 = vsub.s32 0, %v52
    %v54 = vrot.slane %v50, %v53
    %v59 = vunpack.c.l.b16 %v46
    %v60 = vunpack.c.l.b16 %v47
    %v61 = vunpack.c.l.b16 %v48
    %v62 = vunpack.c.l.b16 %v49
    %v63 = vpack.c.b16 %v60, %v59
    %v64 = vpack.c.b16 %v62, %v61
    %vm67 = vcmask 261120
    %v69 = vsel %vm67, %v45, 0
    %71 = vmatprep.subr.bf16.mxu0 0
    %72 = vmatpush1.bf16.msra.mxu0 0
    %73 = vmatprep.subr.bf16.mxu0 0
    %74 = vmatpush1.bf16.msra.mxu0 0
    %75 = vmatprep.subr.bf16.mxu0 0
    %76 = vmatpush1.bf16.msra.mxu0 0
    %77 = vmatprep.subr.bf16.mxu0 0
    %78 = vmatpush1.bf16.msra.mxu0 0
    %79 = vmatprep.subr.bf16.mxu0 0
    %80 = vmatpush1.bf16.msra.mxu0 0
    %81 = vmatprep.subr.bf16.mxu0 0
    %82 = vmatpush1.bf16.msra.mxu0 0
    %83 = vmatprep.subr.bf16.mxu0 0
    %84 = vmatpush1.bf16.msra.mxu0 %v64
    %85 = vmatprep.subr.bf16.mxu0 0
    %86 = vmatpush1.bf16.msra.mxu0 %v63
    %87 = vmatprep.subr.bf16.mxu0 0
    %88 = vmatpush2.bf16.msra.mxu0 0
    %89 = vmatprep.subr.bf16.mxu0 0
    %90 = vmatpush2.bf16.msra.mxu0 0
    %91 = vmatprep.subr.bf16.mxu0 0
    %92 = vmatpush2.bf16.msra.mxu0 0
    %93 = vmatprep.subr.bf16.mxu0 0
    %94 = vmatpush2.bf16.msra.mxu0 0
    %95 = vmatprep.subr.bf16.mxu0 0
    %96 = vmatpush2.bf16.msra.mxu0 0
    %97 = vmatprep.subr.bf16.mxu0 0
    %98 = vmatpush2.bf16.msra.mxu0 0
    %99 = vmatprep.subr.bf16.mxu0 0
    %100 = vmatpush2.bf16.msra.mxu0 0
    %101 = vmatprep.subr.bf16.mxu0 0
    %102 = vmatpush2.bf16.msra.mxu0 0
    %103 = vmatprep.mubr.bf16.mxu0 0
    %104 = vmatmul.mubr.bf16.gmra.mxu0 %v69
    %v105 = vpop.f32.mrf.mxu0
    %v106 = vadd.f32 %v54, %v105
    %v107 = vpop.f32.mrf.mxu0
    %v108 = vpop.f32.mrf.mxu0
    %v109 = vpop.f32.mrf.mxu0
    %110 = vdwg.mxu0
    %v111 = vmul.f32 %v106, 0.5
    %v112 = vtanh.pop %v111
    %v113 = vadd.f32 %v112, 1.0
    %v114 = vmul.f32 %v113, 0.5
    %s115 = sld [smem:[#allocation2]]
    %v116 = vld [vmem:[%s2 + $0x1] sm:$0x1]
    %v117 = vlaneseq
    %v118 = vshrl.u32 %v117, 7
    %v119 = vsub.s32 0, %v118
    %v120 = vrot.slane %v116, %v119
    %v121 = vmul.f32 %v114, %v120
    %122 = vadd.xlane.f32.xlu0 %v121
    %v123 = vpop.xlane.xlu0 %122
    %v124 = vstv %s115
    %v125 = vadd.f32 %v123, %v124
    %v126 = vmul.f32 %v125, 0.5
    %v127 = vtanh.pop %v126
    %v128 = vadd.f32 %v127, 1.0
    %v129 = vmul.f32 %v128, 0.5
    %vm130 = vcmask 7168
    %131 = vst.msk [vmem:[%s4] sm:$0xff] %vm130, %v129
    // Predicated region
    $region26: #{tpu_custom_call.1} parent=1 // pred_check
      _
    $region27: #{tpu_custom_call.1} parent=1 // pred_check_branch
      %133 = sbr.rel (0) target = $region29
    $region28: #{tpu_custom_call.1} parent=1 // pred_region
      _
    $region29: #{tpu_custom_call.1} parent=1 // pred_fallthru
      _
    // Predicated region
    $region30: #{tpu_custom_call.1} parent=1 // pred_check
      _
    $region31: #{tpu_custom_call.1} parent=1 // pred_check_branch
      %135 = sbr.rel (0) target = $region33
    $region32: #{tpu_custom_call.1} parent=1 // pred_region
      _
    $region33: #{tpu_custom_call.1} parent=1 // pred_fallthru
      _
    %136 = vsyncpa [#allocation4], 1
    %137 = vsyncpa [#allocation6], 1

</llo_original>
